<compile_context>
chip_gen: v7x
topology: tpu7x:2x2x1
jax: 0.10.0
libtpu: 0.0.40
codegen_flags: <defaults>
</compile_context>

<pallas_src>
import functools
import math

import jax
import jax.numpy as jnp
from jax.experimental import pallas as pl
from jax.experimental.pallas import tpu as pltpu


def _round_up(x, m):
    return ((x + m - 1) // m) * m


def _derive_vmem_limit():
    """VMEM budget with headroom: ~48 MiB on v7x (64 MiB/TC), ~96 MiB on v5e/v6e (128 MiB)."""
    try:
        cap = pltpu.get_tpu_info().vmem_capacity_bytes
        return int(cap * 3 // 4)
    except Exception:
        return None


_VMEM_LIMIT = _derive_vmem_limit()


# ----------------------------------------------------------------------------
# Pallas kernels
# ----------------------------------------------------------------------------

def _mm_epilogue_kernel(*refs, apply_relu, has_residual):
    """(M,N,K)-tiled matmul accumulating into the resident f32 output block.

    On the last K step: out = acc * scale + bias [+ residual]; optional ReLU.
    """
    if has_residual:
        a_ref, b_ref, scale_ref, bias_ref, res_ref, o_ref = refs
    else:
        a_ref, b_ref, scale_ref, bias_ref, o_ref = refs
        res_ref = None

    k = pl.program_id(2)

    @pl.when(k == 0)
    def _():
        o_ref[...] = jnp.zeros_like(o_ref)

    o_ref[...] += jnp.dot(a_ref[...], b_ref[...], preferred_element_type=jnp.float32)

    @pl.when(k == pl.num_programs(2) - 1)
    def _():
        out = o_ref[...] * scale_ref[...] + bias_ref[...]
        if has_residual:
            out = out + res_ref[...]
        if apply_relu:
            out = jnp.maximum(out, 0.0)
        o_ref[...] = out


def _maxpool_kernel(x_ref, o_ref, *, ho, wo, c):
    """3x3 / stride-2 max pool.

    x_ref: (Ho+1, 2, Wo+1, 2*C) view of the zero-padded activation; each of the 9 taps
    is a plain unit-stride slice of it (row/col stride folded into phase dims / lanes).
    """
    h_sel = ((0, 0), (0, 1), (1, 0))     # (row offset, row parity) for di = 0, 1, 2
    w_sel = ((0, 0), (0, c), (1, 0))     # (col offset, lane offset) for dj = 0, 1, 2
    acc = None
    for hs, hp in h_sel:
        for ws, cs in w_sel:
            tap = x_ref[hs:hs + ho, hp, ws:ws + wo, cs:cs + c]
            acc = tap if acc is None else jnp.maximum(acc, tap)
    o_ref[...] = acc


def _global_avgpool_kernel(x_ref, o_ref):
    # x: (N, H*W, tc) -> mean over the spatial axis
    o_ref[...] = jnp.mean(x_ref[...], axis=1)


# ----------------------------------------------------------------------------
# pallas_call factories (cached by static shape / tile config)
# ----------------------------------------------------------------------------

@functools.lru_cache(maxsize=None)
def _make_matmul(Mp, Kp, Np, tm, tk, tn, apply_relu, has_residual):
    kernel = functools.partial(
        _mm_epilogue_kernel, apply_relu=apply_relu, has_residual=has_residual)
    in_specs = [
        pl.BlockSpec((tm, tk), lambda i, j, k: (i, k)),    # A  (bf16)
        pl.BlockSpec((tk, tn), lambda i, j, k: (k, j)),    # B  (bf16)
        pl.BlockSpec((1, tn), lambda i, j, k: (0, j)),     # scale (f32)
        pl.BlockSpec((1, tn), lambda i, j, k: (0, j)),     # bias  (f32)
    ]
    if has_residual:
        in_specs.append(pl.BlockSpec((tm, tn), lambda i, j, k: (i, j)))  # residual (f32)
    return pl.pallas_call(
        kernel,
        out_shape=jax.ShapeDtypeStruct((Mp, Np), jnp.float32),
        grid_spec=pltpu.PrefetchScalarGridSpec(
            num_scalar_prefetch=0,
            grid=(Mp // tm, Np // tn, Kp // tk),           # K innermost (accumulator axis)
            in_specs=in_specs,
            out_specs=pl.BlockSpec((tm, tn), lambda i, j, k: (i, j)),
        ),
        compiler_params=pltpu.CompilerParams(
            dimension_semantics=("parallel", "parallel", "arbitrary"),
            vmem_limit_bytes=_VMEM_LIMIT,
        ),
    )


def _pick_m(M):
    if M > 256:
        Mp = _round_up(M, 128)
        tm = 256 if Mp % 256 == 0 else 128
    else:
        Mp = _round_up(max(M, 16), 16)
        tm = Mp
    return Mp, tm


def _pick_n(N):
    Np = _round_up(N, 128)
    tn = 256 if Np % 256 == 0 else 128
    return Np, tn


def _pick_k(K):
    if K <= 1152:                       # single full-K step: no padding of K to 128
        Kp = _round_up(K, 16)
        tk = Kp
    else:
        Kp = _round_up(K, 128)
        tk = 512 if Kp % 512 == 0 else (256 if Kp % 256 == 0 else 128)
    return Kp, tk


def matmul_scale_bias(a, b, scale, bias, apply_relu, residual=None):
    """relu?( (a @ b) * scale + bias [+ residual] ), bf16 MXU operands, f32 accumulation."""
    M, K = a.shape
    _, N = b.shape
    Mp, tm = _pick_m(M)
    Np, tn = _pick_n(N)
    Kp, tk = _pick_k(K)

    a_p = a.astype(jnp.bfloat16)
    if Mp != M or Kp != K:
        a_p = jnp.pad(a_p, ((0, Mp - M), (0, Kp - K)))
    b_p = b.astype(jnp.bfloat16)
    if Kp != K or Np != N:
        b_p = jnp.pad(b_p, ((0, Kp - K), (0, Np - N)))

    scale_p = scale.reshape(1, N).astype(jnp.float32)
    bias_p = bias.reshape(1, N).astype(jnp.float32)
    if Np != N:
        scale_p = jnp.pad(scale_p, ((0, 0), (0, Np - N)))
        bias_p = jnp.pad(bias_p, ((0, 0), (0, Np - N)))

    args = [a_p, b_p, scale_p, bias_p]
    has_residual = residual is not None
    if has_residual:
        r = residual.astype(jnp.float32)
        if Mp != M or Np != N:
            r = jnp.pad(r, ((0, Mp - M), (0, Np - N)))
        args.append(r)

    fn = _make_matmul(Mp, Kp, Np, tm, tk, tn, bool(apply_relu), has_residual)
    out = fn(*args)
    if Mp != M or Np != N:
        out = out[:M, :N]
    return out


@functools.lru_cache(maxsize=None)
def _make_maxpool(n, ho, wo, c):
    kernel = functools.partial(_maxpool_kernel, ho=ho, wo=wo, c=c)
    return pl.pallas_call(
        kernel,
        out_shape=jax.ShapeDtypeStruct((n, ho, wo, c), jnp.float32),
        grid_spec=pltpu.PrefetchScalarGridSpec(
            num_scalar_prefetch=0,
            grid=(n,),
            in_specs=[pl.BlockSpec((None, ho + 1, 2, wo + 1, 2 * c),
                                   lambda i: (i, 0, 0, 0, 0))],
            out_specs=pl.BlockSpec((None, ho, wo, c), lambda i: (i, 0, 0, 0)),
        ),
        compiler_params=pltpu.CompilerParams(
            dimension_semantics=("parallel",),
            vmem_limit_bytes=_VMEM_LIMIT,
        ),
    )


def maxpool_3x3_s2(x):
    """3x3 max pool, stride 2, pad 1 (input is post-ReLU NHWC with even H, W)."""
    n, h, w, c = x.shape
    assert h % 2 == 0 and w % 2 == 0
    ho, wo = h // 2, w // 2
    # Zero padding is exact here: the input is post-ReLU (>= 0), so including a 0 never
    # changes the window max.
    xp = jnp.pad(x, ((0, 0), (1, 1), (1, 1), (0, 0)))
    # Free reshape: split H into (row, parity) and fold the W parity into the lane dim so
    # every pooling tap becomes a unit-stride slice inside the kernel (no 9x HBM tap stack).
    xr = xp.reshape(n, ho + 1, 2, wo + 1, 2 * c)
    return _make_maxpool(n, ho, wo, c)(xr)


@functools.lru_cache(maxsize=None)
def _make_global_avgpool(n, hw, c, tc):
    return pl.pallas_call(
        _global_avgpool_kernel,
        out_shape=jax.ShapeDtypeStruct((n, c), jnp.float32),
        grid_spec=pltpu.PrefetchScalarGridSpec(
            num_scalar_prefetch=0,
            grid=(c // tc,),
            in_specs=[pl.BlockSpec((n, hw, tc), lambda j: (0, 0, j))],
            out_specs=pl.BlockSpec((n, tc), lambda j: (0, j)),
        ),
        compiler_params=pltpu.CompilerParams(
            dimension_semantics=("parallel",),
            vmem_limit_bytes=_VMEM_LIMIT,
        ),
    )


def global_avgpool_flatten(x):
    n, h, w, c = x.shape
    hw = h * w
    if c % 256 == 0:
        tc = 256
    elif c % 128 == 0:
        tc = 128
    else:
        tc = c
    return _make_global_avgpool(n, hw, c, tc)(x.reshape(n, hw, c))


# ----------------------------------------------------------------------------
# Conv building blocks (im2col/reshape glue in JAX, compute in Pallas)
# ----------------------------------------------------------------------------

def _im2col(x, kh, kw, stride, pad):
    n, h, w, c = x.shape
    xp = jnp.pad(x, ((0, 0), (pad, pad), (pad, pad), (0, 0)))
    ho = (h + 2 * pad - kh) // stride + 1
    wo = (w + 2 * pad - kw) // stride + 1
    cols = []
    for i in range(kh):
        for j in range(kw):
            cols.append(xp[:, i:i + ho * stride:stride, j:j + wo * stride:stride, :])
    patches = jnp.concatenate(cols, axis=-1)   # (N, Ho, Wo, kh*kw*C) in (kh, kw, Cin) order
    return patches.reshape(n * ho * wo, kh * kw * c), ho, wo


def conv_bn(x, w, scale, bias, stride, pad, relu, residual=None):
    """conv2d (NHWC) + folded BN + optional fused residual add + optional ReLU."""
    n = x.shape[0]
    kh, kw, cin, cout = w.shape
    if kh == 1 and kw == 1 and pad == 0:
        if stride != 1:
            x = x[:, ::stride, ::stride, :]
        ho, wo = x.shape[1], x.shape[2]
        patches = x.reshape(n * ho * wo, cin)        # 1x1 conv: im2col is a pure reshape
    else:
        # TODO(synk): fold the kh*kw taps into the matmul reduction grid instead of
        #             materializing im2col patches in HBM.
        patches, ho, wo = _im2col(x.astype(jnp.bfloat16), kh, kw, stride, pad)
    wmat = w.reshape(kh * kw * cin, cout)
    res2d = None if residual is None else residual.reshape(n * ho * wo, cout)
    out = matmul_scale_bias(patches, wmat, scale, bias, relu, residual=res2d)
    return out.reshape(n, ho, wo, cout)


# ----------------------------------------------------------------------------
# ResNet50 parameters (synthetic, deterministic) and forward pass
# ----------------------------------------------------------------------------

def _conv_w(key, cin, cout, k):
    fan_in = cin * k * k
    return jax.random.normal(key, (k, k, cin, cout), jnp.float32) * math.sqrt(2.0 / fan_in)


def _bn_fold(c, eps=1e-5):
    gamma = jnp.ones((c,), jnp.float32)
    beta = jnp.zeros((c,), jnp.float32)
    mean = jnp.zeros((c,), jnp.float32)
    var = jnp.ones((c,), jnp.float32)
    scale = gamma / jnp.sqrt(var + eps)
    bias = beta - mean * scale
    return scale, bias


def make_image_model_params(key, middle_hidden_size):
    keys = iter(jax.random.split(key, 128))
    params = {}
    params["conv1_w"] = _conv_w(next(keys), 3, 64, 7)
    params["conv1_scale"], params["conv1_bias"] = _bn_fold(64)

    layers_cfg = [(64, 3, 1), (128, 4, 2), (256, 6, 2), (512, 3, 2)]  # resnet50
    in_ch = 64
    blocks = []
    for planes, nblocks, layer_stride in layers_cfg:
        for bi in range(nblocks):
            s = layer_stride if bi == 0 else 1
            p = {"stride": s}
            p["w1"] = _conv_w(next(keys), in_ch, planes, 1)
            p["s1"], p["b1"] = _bn_fold(planes)
            p["w2"] = _conv_w(next(keys), planes, planes, 3)
            p["s2"], p["b2"] = _bn_fold(planes)
            p["w3"] = _conv_w(next(keys), planes, planes * 4, 1)
            p["s3"], p["b3"] = _bn_fold(planes * 4)
            if s != 1 or in_ch != planes * 4:
                p["wd"] = _conv_w(next(keys), in_ch, planes * 4, 1)
                p["sd"], p["bd"] = _bn_fold(planes * 4)
            blocks.append(p)
            in_ch = planes * 4
    params["blocks"] = blocks

    # trans: Linear(2048 -> middle_hidden_size) + ReLU (Dropout is eval-mode identity)
    params["fc_w"] = jax.random.normal(next(keys), (2048, middle_hidden_size), jnp.float32) * (
        1.0 / math.sqrt(2048.0))
    params["fc_b"] = jnp.zeros((middle_hidden_size,), jnp.float32)
    return params


def _bottleneck(x, p):
    identity = x
    out = conv_bn(x, p["w1"], p["s1"], p["b1"], stride=1, pad=0, relu=True)
    out = conv_bn(out, p["w2"], p["s2"], p["b2"], stride=p["stride"], pad=1, relu=True)
    if "wd" in p:
        identity = conv_bn(x, p["wd"], p["sd"], p["bd"], stride=p["stride"], pad=0, relu=False)
    # conv3 + BN + residual add + ReLU fused into one Pallas matmul epilogue.
    out = conv_bn(out, p["w3"], p["s3"], p["b3"], stride=1, pad=0, relu=True, residual=identity)
    return out


def image_model_forward(params, imgs_nchw):
    """ImageModel.forward(imgs): resnet50 features -> flatten -> dropout(eval) -> linear -> relu."""
    x = jnp.transpose(imgs_nchw, (0, 2, 3, 1))          # NCHW -> NHWC
    x = conv_bn(x, params["conv1_w"], params["conv1_scale"], params["conv1_bias"],
                stride=2, pad=3, relu=True)
    x = maxpool_3x3_s2(x)
    for p in params["blocks"]:
        x = _bottleneck(x, p)
    feature = global_avgpool_flatten(x)                 # (N, 2048) == AdaptiveAvgPool2d(1)+Flatten
    # Dropout (eval) = identity; Linear + ReLU fused in the matmul epilogue kernel.
    mh = params["fc_w"].shape[1]
    out = matmul_scale_bias(feature, params["fc_w"],
                            jnp.ones((mh,), jnp.float32), params["fc_b"], apply_relu=True)
    return out


# ----------------------------------------------------------------------------
# Demo
# ----------------------------------------------------------------------------

if __name__ == "__main__":
    middle_hidden_size = 64
    key = jax.random.PRNGKey(0)
    pkey, xkey = jax.random.split(key)

    params = make_image_model_params(pkey, middle_hidden_size)
    imgs = jax.random.normal(xkey, (2, 3, 32, 32), jnp.float32)  # NCHW, like PyTorch

    out = image_model_forward(params, imgs)
    out = jax.block_until_ready(out)

    assert out.shape == (2, middle_hidden_size), out.shape
    assert out.dtype == jnp.float32
    assert bool(jnp.all(out >= 0.0))          # final ReLU
    assert bool(jnp.all(jnp.isfinite(out)))
    print("KERNEL_OK")
</pallas_src>

<mosaic_0001>
module attributes {stable_mosaic.version = 11 : i64} {
  func.func @_mm_epilogue_kernel(%arg0: i32, %arg1: i32, %arg2: i32, %arg3: memref<256x160xbf16, #tpu.memory_space<vmem>>, %arg4: memref<160x128xbf16, #tpu.memory_space<vmem>>, %arg5: memref<1x128xf32, #tpu.memory_space<vmem>>, %arg6: memref<1x128xf32, #tpu.memory_space<vmem>>, %arg7: memref<256x128xf32, #tpu.memory_space<vmem>>) attributes {dimension_semantics = [#tpu.dimension_semantics<parallel>, #tpu.dimension_semantics<parallel>, #tpu.dimension_semantics<arbitrary>], iteration_bounds = array<i64: 2, 1, 1>, scalar_prefetch = 0 : i64, scratch_operands = 0 : i64, tpu.core_type = #tpu.core_type<tc>, window_params = [{transform_indices = @transform_0, window_bounds = array<i64: 256, 160>}, {transform_indices = @transform_1, window_bounds = array<i64: 160, 128>}, {transform_indices = @transform_2, window_bounds = array<i64: 1, 128>}, {transform_indices = @transform_3, window_bounds = array<i64: 1, 128>}, {transform_indices = @transform_4, window_bounds = array<i64: 256, 128>}]} {
    %c0_i32 = arith.constant 0 : i32
    %0 = arith.cmpi eq, %arg2, %c0_i32 : i32
    %1 = arith.extui %0 : i1 to i32
    %c0_i32_0 = arith.constant 0 : i32
    %2 = arith.cmpi ne, %1, %c0_i32_0 : i32
    scf.if %2 {
      %cst_10 = arith.constant 0.000000e+00 : f32
      %12 = vector.broadcast %cst_10 : f32 to vector<256x128xf32>
      %c0_11 = arith.constant 0 : index
      %c0_12 = arith.constant 0 : index
      %13 = vector.load %arg7[%c0_11, %c0_12] : memref<256x128xf32, #tpu.memory_space<vmem>>, vector<256x128xf32>
      tpu.vector_store %arg7[%c0_11, %c0_12], %12 {strides = array<i32>} : memref<256x128xf32, #tpu.memory_space<vmem>>, vector<256x128xf32>,
    } else {
    }
    %c0 = arith.constant 0 : index
    %c0_1 = arith.constant 0 : index
    %3 = vector.load %arg7[%c0, %c0_1] : memref<256x128xf32, #tpu.memory_space<vmem>>, vector<256x128xf32>
    %c0_2 = arith.constant 0 : index
    %c0_3 = arith.constant 0 : index
    %4 = vector.load %arg3[%c0_2, %c0_3] : memref<256x160xbf16, #tpu.memory_space<vmem>>, vector<256x160xbf16>
    %c0_4 = arith.constant 0 : index
    %c0_5 = arith.constant 0 : index
    %5 = vector.load %arg4[%c0_4, %c0_5] : memref<160x128xbf16, #tpu.memory_space<vmem>>, vector<160x128xbf16>
    %cst = arith.constant dense<0.000000e+00> : vector<256x128xf32>
    %6 = tpu.matmul %4, %5, %cst {dimension_numbers = #tpu.dot_dimension_numbers<[1], [0], [0], [1], [0, 0, 1, 1], [], []>} : vector<256x160xbf16>, vector<160x128xbf16>, vector<256x128xf32> -> vector<256x128xf32>
    %7 = arith.addf %3, %6 : vector<256x128xf32>
    %c0_6 = arith.constant 0 : index
    %c0_7 = arith.constant 0 : index
    %8 = vector.load %arg7[%c0_6, %c0_7] : memref<256x128xf32, #tpu.memory_space<vmem>>, vector<256x128xf32>
    tpu.vector_store %arg7[%c0_6, %c0_7], %7 {strides = array<i32>} : memref<256x128xf32, #tpu.memory_space<vmem>>, vector<256x128xf32>,
    %c0_i32_8 = arith.constant 0 : i32
    %9 = arith.cmpi eq, %arg2, %c0_i32_8 : i32
    %10 = arith.extui %9 : i1 to i32
    %c0_i32_9 = arith.constant 0 : i32
    %11 = arith.cmpi ne, %10, %c0_i32_9 : i32
    scf.if %11 {
      %c0_10 = arith.constant 0 : index
      %c0_11 = arith.constant 0 : index
      %12 = vector.load %arg7[%c0_10, %c0_11] : memref<256x128xf32, #tpu.memory_space<vmem>>, vector<256x128xf32>
      %c0_12 = arith.constant 0 : index
      %c0_13 = arith.constant 0 : index
      %13 = vector.load %arg5[%c0_12, %c0_13] : memref<1x128xf32, #tpu.memory_space<vmem>>, vector<1x128xf32>
      %14 = vector.broadcast %13 : vector<1x128xf32> to vector<256x128xf32>
      %15 = arith.mulf %12, %14 : vector<256x128xf32>
      %c0_14 = arith.constant 0 : index
      %c0_15 = arith.constant 0 : index
      %16 = vector.load %arg6[%c0_14, %c0_15] : memref<1x128xf32, #tpu.memory_space<vmem>>, vector<1x128xf32>
      %17 = vector.broadcast %16 : vector<1x128xf32> to vector<256x128xf32>
      %18 = arith.addf %15, %17 : vector<256x128xf32>
      %cst_16 = arith.constant 0.000000e+00 : f32
      %19 = vector.broadcast %cst_16 : f32 to vector<256x128xf32>
      %20 = arith.maximumf %18, %19 : vector<256x128xf32>
      %c0_17 = arith.constant 0 : index
      %c0_18 = arith.constant 0 : index
      %21 = vector.load %arg7[%c0_17, %c0_18] : memref<256x128xf32, #tpu.memory_space<vmem>>, vector<256x128xf32>
      tpu.vector_store %arg7[%c0_17, %c0_18], %20 {strides = array<i32>} : memref<256x128xf32, #tpu.memory_space<vmem>>, vector<256x128xf32>,
    } else {
    }
    return
  }
  func.func @transform_0(%arg0: i32, %arg1: i32, %arg2: i32) -> (i32, i32) {
    %c0_i32 = arith.constant 0 : i32
    return %arg0, %arg2 : i32, i32
  }
  func.func @transform_1(%arg0: i32, %arg1: i32, %arg2: i32) -> (i32, i32) {
    %c0_i32 = arith.constant 0 : i32
    return %arg2, %arg1 : i32, i32
  }
  func.func @transform_2(%arg0: i32, %arg1: i32, %arg2: i32) -> (i32, i32) {
    %c0_i32 = arith.constant 0 : i32
    %c0_i32_0 = arith.constant 0 : i32
    return %c0_i32, %arg1 : i32, i32
  }
  func.func @transform_3(%arg0: i32, %arg1: i32, %arg2: i32) -> (i32, i32) {
    %c0_i32 = arith.constant 0 : i32
    %c0_i32_0 = arith.constant 0 : i32
    return %c0_i32, %arg1 : i32, i32
  }
  func.func @transform_4(%arg0: i32, %arg1: i32, %arg2: i32) -> (i32, i32) {
    %c0_i32 = arith.constant 0 : i32
    return %arg0, %arg1 : i32, i32
  }
}

</mosaic_0001>

<llo_original>
// kernel: tpu_custom_call.1
$region0: #{tpu_custom_call.1}
  #allocation0 [shape = 'u32[]', space=smem, size = 0x4, offset = 0x4, fixed_abs, tag = 'smem constant byte address 0x4 - core index']
  #allocation1 [shape = 'u32[144,128]{1,0:T(1,128)}', space=vmem, size = 0x12000, scoped, tag = 'internal scratch']
  %s0 = inlined_call_operand.vmem [shape: bf16[512,160], index: 0, kind: input, shape index: {}]
  %s1 = inlined_call_operand.vmem [shape: bf16[160,128], index: 1, kind: input, shape index: {}]
  %s2 = inlined_call_operand.vmem [shape: f32[1,128], index: 2, kind: input, shape index: {}]
  %s3 = inlined_call_operand.vmem [shape: f32[1,128], index: 3, kind: input, shape index: {}]
  %s4 = inlined_call_operand.hbm [shape: f32[512,128], index: 4, kind: output, shape index: {}]
  %s5 = sld [smem:[#allocation0]]
  $region57: #{tpu_custom_call.1} parent=0
    _
  %s7 = ssub.s32 1, %s5
  %s8 = scalar_select 0, %s7, %s5
  $region1: #{tpu_custom_call.1} parent=0
    #allocation2 [shape = 'u8[262144]{0}', space=vmem, size = 0x40000, scoped, tag = 'output window, operand 0']
    #allocation3 [shape = 's32[2]{0}', space=sflag, size = 0x8, scoped, tag = 'scoped memory for tpu_custom_call.1']
    %9 = vsyncpa [#allocation3], 0
    %s10 = scalar_lea.sflag [#allocation3], 1
    %11 = vsyncpa %s10, 0
    loop: start=0, step=1, limit=4
    $region2: #{tpu_custom_call.1} parent=1 // loop_pre_header
      _
    $region3: #{tpu_custom_call.1} parent=1 // loop_header
      %s13 = sphi 0, %s17
      %p14 = scmp.ge.s32.totalorder %s13, 4
      %s20 = sphi 0, %s39
      %s21 = sphi 0, %s35
      %s22 = sphi 0, %s31
      %s23 = sphi 0, %s20
      %s24 = sphi 0, %s21
      %s25 = sphi 0, %s22
      %s26 = sphi 0, %s23
      %s27 = sphi 0, %s24
      %s28 = sphi 0, %s25
      %s44 = sphi 0, %s46
      %s47 = sphi 0, %s44
      %s48 = sphi 0, %s47
      %s64 = sphi 0, %s48
      %s72 = sphi 0, %s74
      %s75 = sphi 0, %s72
      %s76 = sphi 0, %s75
      %s92 = sphi 0, %s76
      %s98 = sphi 0, %s100
      %s101 = sphi 0, %s98
      %s102 = sphi 0, %s101
      %s118 = sphi 0, %s102
      %s124 = sphi 0, %s126
      %s127 = sphi 0, %s124
      %s128 = sphi 0, %s127
      %s144 = sphi 0, %s128
      %s152 = sphi 0, %s154
      %s155 = sphi 0, %s152
      %s156 = sphi 0, %s155
      %s172 = sphi 0, %s156
    $region4: #{tpu_custom_call.1} parent=1 // loop_header_branch
      %16 = sbr.rel (%p14) target = $region8
    $region5: #{tpu_custom_call.1} parent=1 // loop_body
      %s18 = ssub.s32 %s13, 1
      %s19 = ssub.s32 %s13, 2
      %s29 = sadd.s32 1, %s22
      %p30 = scmp.ge.s32.totalorder %s29, 1
      %s31 = scalar_select %p30, 0, %s29
      %s32 = sadd.s32 1, %s21
      %s33 = scalar_select %p30, %s32, %s21
      %p34 = scmp.ge.s32.totalorder %s33, 1
      %s35 = scalar_select %p34, 0, %s33
      %s36 = sadd.s32 1, %s20
      %s37 = scalar_select %p34, %s36, %s20
      %p38 = scmp.ge.s32.totalorder %s37, 2
      %s39 = scalar_select %p38, 0, %s37
      %s40 = ssub.s32 %s20, %s39
      %s41 = ssub.s32 %s22, %s31
      %s42 = sor.u32 %s40, %s41
      %p43 = scmp.eq.s32.totalorder %s42, 0
      %s45 = sadd.s32 %s44, 1
      %s46 = scalar_select %p43, %s44, %s45
      %p49 = pneg %p43
      %p50 = scmp.eq.s32.totalorder %s13, 1
      %p51 = por %p49, %p50
      %p52 = scmp.ne.s32.totalorder %s44, %s47
      %p53 = scmp.eq.s32.totalorder %s13, 0
      %p54 = por %p52, %p53
      %p55 = scmp.ne.s32.totalorder %s44, %s47
      %p56 = scmp.eq.s32.totalorder %s18, 1
      %p57 = por %p55, %p56
      %p58 = scmp.ne.s32.totalorder %s47, %s48
      %p59 = scmp.eq.s32.totalorder %s18, 0
      %p60 = por %p58, %p59
      %p61 = scmp.ne.s32.totalorder %s47, %s48
      %p62 = scmp.eq.s32.totalorder %s19, 1
      %p63 = por %p61, %p62
      %p65 = scmp.ne.s32.totalorder %s48, %s64
      %p66 = scmp.eq.s32.totalorder %s19, 0
      %p67 = por %p65, %p66
      %s68 = ssub.s32 %s22, %s31
      %s69 = ssub.s32 %s21, %s35
      %s70 = sor.u32 %s68, %s69
      %p71 = scmp.eq.s32.totalorder %s70, 0
      %s73 = sadd.s32 %s72, 1
      %s74 = scalar_select %p71, %s72, %s73
      %p77 = pneg %p71
      %p78 = scmp.eq.s32.totalorder %s13, 1
      %p79 = por %p77, %p78
      %p80 = scmp.ne.s32.totalorder %s72, %s75
      %p81 = scmp.eq.s32.totalorder %s13, 0
      %p82 = por %p80, %p81
      %p83 = scmp.ne.s32.totalorder %s72, %s75
      %p84 = scmp.eq.s32.totalorder %s18, 1
      %p85 = por %p83, %p84
      %p86 = scmp.ne.s32.totalorder %s75, %s76
      %p87 = scmp.eq.s32.totalorder %s18, 0
      %p88 = por %p86, %p87
      %p89 = scmp.ne.s32.totalorder %s75, %s76
      %p90 = scmp.eq.s32.totalorder %s19, 1
      %p91 = por %p89, %p90
      %p93 = scmp.ne.s32.totalorder %s76, %s92
      %p94 = scmp.eq.s32.totalorder %s19, 0
      %p95 = por %p93, %p94
      %s96 = ssub.s32 %s21, %s35
      %p97 = scmp.eq.s32.totalorder %s96, 0
      %s99 = sadd.s32 %s98, 1
      %s100 = scalar_select %p97, %s98, %s99
      %p103 = pneg %p97
      %p104 = scmp.eq.s32.totalorder %s13, 1
      %p105 = por %p103, %p104
      %p106 = scmp.ne.s32.totalorder %s98, %s101
      %p107 = scmp.eq.s32.totalorder %s13, 0
      %p108 = por %p106, %p107
      %p109 = scmp.ne.s32.totalorder %s98, %s101
      %p110 = scmp.eq.s32.totalorder %s18, 1
      %p111 = por %p109, %p110
      %p112 = scmp.ne.s32.totalorder %s101, %s102
      %p113 = scmp.eq.s32.totalorder %s18, 0
      %p114 = por %p112, %p113
      %p115 = scmp.ne.s32.totalorder %s101, %s102
      %p116 = scmp.eq.s32.totalorder %s19, 1
      %p117 = por %p115, %p116
      %p119 = scmp.ne.s32.totalorder %s102, %s118
      %p120 = scmp.eq.s32.totalorder %s19, 0
      %p121 = por %p119, %p120
      %s122 = ssub.s32 %s21, %s35
      %p123 = scmp.eq.s32.totalorder %s122, 0
      %s125 = sadd.s32 %s124, 1
      %s126 = scalar_select %p123, %s124, %s125
      %p129 = pneg %p123
      %p130 = scmp.eq.s32.totalorder %s13, 1
      %p131 = por %p129, %p130
      %p132 = scmp.ne.s32.totalorder %s124, %s127
      %p133 = scmp.eq.s32.totalorder %s13, 0
      %p134 = por %p132, %p133
      %p135 = scmp.ne.s32.totalorder %s124, %s127
      %p136 = scmp.eq.s32.totalorder %s18, 1
      %p137 = por %p135, %p136
      %p138 = scmp.ne.s32.totalorder %s127, %s128
      %p139 = scmp.eq.s32.totalorder %s18, 0
      %p140 = por %p138, %p139
      %p141 = scmp.ne.s32.totalorder %s127, %s128
      %p142 = scmp.eq.s32.totalorder %s19, 1
      %p143 = por %p141, %p142
      %p145 = scmp.ne.s32.totalorder %s128, %s144
      %p146 = scmp.eq.s32.totalorder %s19, 0
      %p147 = por %p145, %p146
      %s148 = ssub.s32 %s20, %s39
      %s149 = ssub.s32 %s21, %s35
      %s150 = sor.u32 %s148, %s149
      %p151 = scmp.eq.s32.totalorder %s150, 0
      %s153 = sadd.s32 %s152, 1
      %s154 = scalar_select %p151, %s152, %s153
      %p157 = pneg %p151
      %p158 = scmp.eq.s32.totalorder %s13, 1
      %p159 = por %p157, %p158
      %p160 = scmp.ne.s32.totalorder %s152, %s155
      %p161 = scmp.eq.s32.totalorder %s13, 0
      %p162 = por %p160, %p161
      %p163 = scmp.ne.s32.totalorder %s152, %s155
      %p164 = scmp.eq.s32.totalorder %s18, 1
      %p165 = por %p163, %p164
      %p166 = scmp.ne.s32.totalorder %s155, %s156
      %p167 = scmp.eq.s32.totalorder %s18, 0
      %p168 = por %p166, %p167
      %p169 = scmp.ne.s32.totalorder %s155, %s156
      %p170 = scmp.eq.s32.totalorder %s19, 1
      %p171 = por %p169, %p170
      %p173 = scmp.ne.s32.totalorder %s156, %s172
      %p174 = scmp.eq.s32.totalorder %s19, 0
      %p175 = por %p173, %p174
      %p176 = scmp.le.s32.totalorder 1, %s13
      %p177 = scmp.lt.s32.totalorder %s13, 3
      %p178 = pnand %p176, %p177
      %p179 = pneg %p178
      // Predicated region
      $region9: #{tpu_custom_call.1} parent=5 // pred_check
        _
      $region10: #{tpu_custom_call.1} parent=5 // pred_check_branch
        %181 = sbr.rel (%p178) target = $region12
      $region11: #{tpu_custom_call.1} parent=5 // pred_region
        %s182 = ssub.s32 %s13, 1
        // Predicated region
        $region13: #{tpu_custom_call.1} parent=11 // pred_check
          %p183 = pneg %p88
        $region14: #{tpu_custom_call.1} parent=11 // pred_check_branch
          %185 = sbr.rel (%p183) target = $region16
        $region15: #{tpu_custom_call.1} parent=11 // pred_region
          %s186 = smul.u32 20, %s25
          %p187 = scmp.lt.s32.totalorder %s186, 19
          %s188 = scalar_select %p187, %s186, 19
          %p189 = scmp.lt.s32.totalorder %s24, 0
          %s190 = scalar_select %p189, %s24, 0
          %s191 = sadd.s32 %s190, %s188
          %s192 = smul.addr %s191, 4
          %s193 = scalar_lea.vmem %s1, %s192
          %s194 = smul.u32 20, %s25
        $region16: #{tpu_custom_call.1} parent=11 // pred_fallthru
          _
        // Predicated region
        $region17: #{tpu_custom_call.1} parent=11 // pred_check
          %p195 = pneg %p114
        $region18: #{tpu_custom_call.1} parent=11 // pred_check_branch
          %197 = sbr.rel (%p195) target = $region20
        $region19: #{tpu_custom_call.1} parent=11 // pred_region
          %p198 = scmp.lt.s32.totalorder %s24, 0
          %s199 = scalar_select %p198, %s24, 0
          %s200 = scalar_lea.vmem %s2, %s199
        $region20: #{tpu_custom_call.1} parent=11 // pred_fallthru
          _
        // Predicated region
        $region21: #{tpu_custom_call.1} parent=11 // pred_check
          %p201 = pneg %p140
        $region22: #{tpu_custom_call.1} parent=11 // pred_check_branch
          %203 = sbr.rel (%p201) target = $region24
        $region23: #{tpu_custom_call.1} parent=11 // pred_region
          %p204 = scmp.lt.s32.totalorder %s24, 0
          %s205 = scalar_select %p204, %s24, 0
          %s206 = scalar_lea.vmem %s3, %s205
        $region24: #{tpu_custom_call.1} parent=11 // pred_fallthru
          _
      $region12: #{tpu_custom_call.1} parent=5 // pred_fallthru
        _
      %p207 = scmp.lt.s32.totalorder %s13, 2
      // Predicated region
      $region25: #{tpu_custom_call.1} parent=5 // pred_check
        %p208 = pneg %p207
      $region26: #{tpu_custom_call.1} parent=5 // pred_check_branch
        %210 = sbr.rel (%p208) target = $region28
      $region27: #{tpu_custom_call.1} parent=5 // pred_region
        // Predicated region
        $region29: #{tpu_custom_call.1} parent=27 // pred_check
          %p211 = pneg %p54
        $region30: #{tpu_custom_call.1} parent=27 // pred_check_branch
          %213 = sbr.rel (%p211) target = $region32
        $region31: #{tpu_custom_call.1} parent=27 // pred_region
          %s214 = smul.u32 32, %s20
          %s215 = smul.u32 2, %s22
          %p216 = scmp.lt.s32.totalorder %s214, 63
          %s217 = scalar_select %p216, %s214, 63
          %p218 = scmp.lt.s32.totalorder %s215, 1
          %s219 = scalar_select %p218, %s215, 1
          %s220 = smul.addr %s217, 2
          %s221 = sadd.s32 %s219, %s220
          %s222 = smul.addr %s221, 4
          %s223 = scalar_lea.vmem %s0, %s222
          %s224 = smul.u32 32, %s20
          %s225 = smul.u32 2, %s22
        $region32: #{tpu_custom_call.1} parent=27 // pred_fallthru
          _
      $region28: #{tpu_custom_call.1} parent=5 // pred_fallthru
        _
      %p226 = scmp.le.s32.totalorder 1, %s13
      %p227 = scmp.lt.s32.totalorder %s13, 3
      %p228 = pnand %p226, %p227
      %p229 = pneg %p228
      // Predicated region
      $region33: #{tpu_custom_call.1} parent=5 // pred_check
        _
      $region34: #{tpu_custom_call.1} parent=5 // pred_check_branch
        %231 = sbr.rel (%p228) target = $region36
      $region35: #{tpu_custom_call.1} parent=5 // pred_region
        %s232 = ssub.s32 %s13, 1
        %s233 = smul.u32 32, %s23
        %s234 = smul.u32 2, %s25
        %p235 = scmp.lt.s32.totalorder %s233, 63
        %s236 = scalar_select %p235, %s233, 63
        %p237 = scmp.lt.s32.totalorder %s234, 1
        %s238 = scalar_select %p237, %s234, 1
        %s239 = smul.addr %s236, 2
        %s240 = sadd.s32 %s238, %s239
        %s241 = smul.addr %s240, 4
        %s242 = scalar_lea.vmem %s0, %s241
        %p243 = pneg %p60
        %p244 = pneg %p57
        %s245 = smul.u32 20, %s25
        %p246 = scmp.lt.s32.totalorder %s245, 19
        %s247 = scalar_select %p246, %s245, 19
        %p248 = scmp.lt.s32.totalorder %s24, 0
        %s249 = scalar_select %p248, %s24, 0
        %s250 = sadd.s32 %s249, %s247
        %s251 = smul.addr %s250, 4
        %s252 = scalar_lea.vmem %s1, %s251
        %p253 = pneg %p88
        %p254 = pneg %p85
        %p255 = scmp.lt.s32.totalorder %s24, 0
        %s256 = scalar_select %p255, %s24, 0
        %s257 = scalar_lea.vmem %s2, %s256
        %p258 = pneg %p114
        %p259 = pneg %p111
        %p260 = scmp.lt.s32.totalorder %s24, 0
        %s261 = scalar_select %p260, %s24, 0
        %s262 = scalar_lea.vmem %s3, %s261
        %p263 = pneg %p140
        %p264 = pneg %p137
        %p265 = pneg %p168
        %p266 = pneg %p165
        %s267 = sand.u32 %s155, 1
        %s268 = scalar_lea.sflag [#allocation3], %s267
        %s269 = sand.u32 %s155, 1
        %s270 = smul.addr %s269, 256
        %s271 = scalar_lea.vmem [#allocation2], %s270
        %s272 = smul.u32 32, %s23
        %s273 = smul.u32 2, %s25
        %p274 = scmp.lt.s32.totalorder %s272, 63
        %s275 = scalar_select %p274, %s272, 63
        %p276 = scmp.lt.s32.totalorder %s273, 1
        %s277 = scalar_select %p276, %s273, 1
        %s278 = smul.addr %s275, 2
        %s279 = sadd.s32 %s277, %s278
        %s280 = smul.addr %s279, 4
        %s281 = scalar_lea.vmem %s0, %s280
        %s282 = smul.u32 32, %s23
        %s283 = smul.u32 2, %s25
        %s284 = smul.u32 20, %s25
        %p285 = scmp.lt.s32.totalorder %s284, 19
        %s286 = scalar_select %p285, %s284, 19
        %p287 = scmp.lt.s32.totalorder %s24, 0
        %s288 = scalar_select %p287, %s24, 0
        %s289 = sadd.s32 %s288, %s286
        %s290 = smul.addr %s289, 4
        %s291 = scalar_lea.vmem %s1, %s290
        %s292 = smul.u32 20, %s25
        %p293 = scmp.lt.s32.totalorder %s24, 0
        %s294 = scalar_select %p293, %s24, 0
        %s295 = scalar_lea.vmem %s2, %s294
        %p296 = scmp.lt.s32.totalorder %s24, 0
        %s297 = scalar_select %p296, %s24, 0
        %s298 = scalar_lea.vmem %s3, %s297
        %s299 = smul.u32 32, %s23
        %p301 = scmp.eq.s32.totalorder %s25, 0
        // Predicated region
        $region37: #{tpu_custom_call.1} parent=35 // pred_check
          %p302 = pneg %p301
        $region38: #{tpu_custom_call.1} parent=35 // pred_check_branch
          %304 = sbr.rel (%p302) target = $region40
        $region39: #{tpu_custom_call.1} parent=35 // pred_region
          %305 = vst [vmem:[%s271] sm:$0xff] 0.0
          %306 = vst [vmem:[%s271 + $0x8] sm:$0xff] 0.0
          %307 = vst [vmem:[%s271 + $0x10] sm:$0xff] 0.0
          %308 = vst [vmem:[%s271 + $0x18] sm:$0xff] 0.0
          %309 = vst [vmem:[%s271 + $0x20] sm:$0xff] 0.0
          %310 = vst [vmem:[%s271 + $0x28] sm:$0xff] 0.0
          %311 = vst [vmem:[%s271 + $0x30] sm:$0xff] 0.0
          %312 = vst [vmem:[%s271 + $0x38] sm:$0xff] 0.0
          %313 = vst [vmem:[%s271 + $0x40] sm:$0xff] 0.0
          %314 = vst [vmem:[%s271 + $0x48] sm:$0xff] 0.0
          %315 = vst [vmem:[%s271 + $0x50] sm:$0xff] 0.0
          %316 = vst [vmem:[%s271 + $0x58] sm:$0xff] 0.0
          %317 = vst [vmem:[%s271 + $0x60] sm:$0xff] 0.0
          %318 = vst [vmem:[%s271 + $0x68] sm:$0xff] 0.0
          %319 = vst [vmem:[%s271 + $0x70] sm:$0xff] 0.0
          %320 = vst [vmem:[%s271 + $0x78] sm:$0xff] 0.0
          %321 = vst [vmem:[%s271 + $0x80] sm:$0xff] 0.0
          %322 = vst [vmem:[%s271 + $0x88] sm:$0xff] 0.0
          %323 = vst [vmem:[%s271 + $0x90] sm:$0xff] 0.0
          %324 = vst [vmem:[%s271 + $0x98] sm:$0xff] 0.0
          %325 = vst [vmem:[%s271 + $0xa0] sm:$0xff] 0.0
          %326 = vst [vmem:[%s271 + $0xa8] sm:$0xff] 0.0
          %327 = vst [vmem:[%s271 + $0xb0] sm:$0xff] 0.0
          %328 = vst [vmem:[%s271 + $0xb8] sm:$0xff] 0.0
          %329 = vst [vmem:[%s271 + $0xc0] sm:$0xff] 0.0
          %330 = vst [vmem:[%s271 + $0xc8] sm:$0xff] 0.0
          %331 = vst [vmem:[%s271 + $0xd0] sm:$0xff] 0.0
          %332 = vst [vmem:[%s271 + $0xd8] sm:$0xff] 0.0
          %333 = vst [vmem:[%s271 + $0xe0] sm:$0xff] 0.0
          %334 = vst [vmem:[%s271 + $0xe8] sm:$0xff] 0.0
          %335 = vst [vmem:[%s271 + $0xf0] sm:$0xff] 0.0
          %336 = vst [vmem:[%s271 + $0xf8] sm:$0xff] 0.0
        $region40: #{tpu_custom_call.1} parent=35 // pred_fallthru
          _
        %v337 = vld [vmem:[%s271] sm:$0xff]
        %v338 = vld [vmem:[%s271 + $0x8] sm:$0xff]
        %v339 = vld [vmem:[%s271 + $0x10] sm:$0xff]
        %v340 = vld [vmem:[%s271 + $0x18] sm:$0xff]
        %v341 = vld [vmem:[%s271 + $0x20] sm:$0xff]
        %v342 = vld [vmem:[%s271 + $0x28] sm:$0xff]
        %v343 = vld [vmem:[%s271 + $0x30] sm:$0xff]
        %v344 = vld [vmem:[%s271 + $0x38] sm:$0xff]
        %v345 = vld [vmem:[%s271 + $0x40] sm:$0xff]
        %v346 = vld [vmem:[%s271 + $0x48] sm:$0xff]
        %v347 = vld [vmem:[%s271 + $0x50] sm:$0xff]
        %v348 = vld [vmem:[%s271 + $0x58] sm:$0xff]
        %v349 = vld [vmem:[%s271 + $0x60] sm:$0xff]
        %v350 = vld [vmem:[%s271 + $0x68] sm:$0xff]
        %v351 = vld [vmem:[%s271 + $0x70] sm:$0xff]
        %v352 = vld [vmem:[%s271 + $0x78] sm:$0xff]
        %v353 = vld [vmem:[%s271 + $0x80] sm:$0xff]
        %v354 = vld [vmem:[%s271 + $0x88] sm:$0xff]
        %v355 = vld [vmem:[%s271 + $0x90] sm:$0xff]
        %v356 = vld [vmem:[%s271 + $0x98] sm:$0xff]
        %v357 = vld [vmem:[%s271 + $0xa0] sm:$0xff]
        %v358 = vld [vmem:[%s271 + $0xa8] sm:$0xff]
        %v359 = vld [vmem:[%s271 + $0xb0] sm:$0xff]
        %v360 = vld [vmem:[%s271 + $0xb8] sm:$0xff]
        %v361 = vld [vmem:[%s271 + $0xc0] sm:$0xff]
        %v362 = vld [vmem:[%s271 + $0xc8] sm:$0xff]
        %v363 = vld [vmem:[%s271 + $0xd0] sm:$0xff]
        %v364 = vld [vmem:[%s271 + $0xd8] sm:$0xff]
        %v365 = vld [vmem:[%s271 + $0xe0] sm:$0xff]
        %v366 = vld [vmem:[%s271 + $0xe8] sm:$0xff]
        %v367 = vld [vmem:[%s271 + $0xf0] sm:$0xff]
        %v368 = vld [vmem:[%s271 + $0xf8] sm:$0xff]
        %v369 = vld [vmem:[%s281] sm:$0xff]
        %v370 = vld [vmem:[%s281 + $0x8] sm:$0xff]
        %v371 = vld [vmem:[%s281 + $0x10] sm:$0xff]
        %v372 = vld [vmem:[%s281 + $0x18] sm:$0xff]
        %v373 = vld [vmem:[%s281 + $0x20] sm:$0xff]
        %v374 = vld [vmem:[%s281 + $0x28] sm:$0xff]
        %v375 = vld [vmem:[%s281 + $0x30] sm:$0xff]
        %v376 = vld [vmem:[%s281 + $0x38] sm:$0xff]
        %v377 = vld [vmem:[%s281 + $0x40] sm:$0xff]
        %v378 = vld [vmem:[%s281 + $0x48] sm:$0xff]
        %v379 = vld [vmem:[%s281 + $0x50] sm:$0xff]
        %v380 = vld [vmem:[%s281 + $0x58] sm:$0xff]
        %v381 = vld [vmem:[%s281 + $0x60] sm:$0xff]
        %v382 = vld [vmem:[%s281 + $0x68] sm:$0xff]
        %v383 = vld [vmem:[%s281 + $0x70] sm:$0xff]
        %v384 = vld [vmem:[%s281 + $0x78] sm:$0xff]
        %v385 = vld [vmem:[%s281 + $0x80] sm:$0xff]
        %v386 = vld [vmem:[%s281 + $0x88] sm:$0xff]
        %v387 = vld [vmem:[%s281 + $0x90] sm:$0xff]
        %v388 = vld [vmem:[%s281 + $0x98] sm:$0xff]
        %v389 = vld [vmem:[%s281 + $0xa0] sm:$0xff]
        %v390 = vld [vmem:[%s281 + $0xa8] sm:$0xff]
        %v391 = vld [vmem:[%s281 + $0xb0] sm:$0xff]
        %v392 = vld [vmem:[%s281 + $0xb8] sm:$0xff]
        %v393 = vld [vmem:[%s281 + $0xc0] sm:$0xff]
        %v394 = vld [vmem:[%s281 + $0xc8] sm:$0xff]
        %v395 = vld [vmem:[%s281 + $0xd0] sm:$0xff]
        %v396 = vld [vmem:[%s281 + $0xd8] sm:$0xff]
        %v397 = vld [vmem:[%s281 + $0xe0] sm:$0xff]
        %v398 = vld [vmem:[%s281 + $0xe8] sm:$0xff]
        %v399 = vld [vmem:[%s281 + $0xf0] sm:$0xff]
        %v400 = vld [vmem:[%s281 + $0xf8] sm:$0xff]
        %v401 = vld [vmem:[%s291] sm:$0xf]
        %v402 = vld [vmem:[%s291 + $0x4] sm:$0xf]
        %v403 = vld [vmem:[%s291 + $0x8] sm:$0xf]
        %v404 = vld [vmem:[%s291 + $0xc] sm:$0xf]
        %v405 = vld [vmem:[%s291 + $0x10] sm:$0xf]
        %v406 = vld [vmem:[%s291 + $0x14] sm:$0xf]
        %v407 = vld [vmem:[%s291 + $0x18] sm:$0xf]
        %v408 = vld [vmem:[%s291 + $0x1c] sm:$0xf]
        %v409 = vld [vmem:[%s291 + $0x20] sm:$0xf]
        %v410 = vld [vmem:[%s291 + $0x24] sm:$0xf]
        %v411 = vld [vmem:[%s291 + $0x28] sm:$0xf]
        %v412 = vld [vmem:[%s291 + $0x2c] sm:$0xf]
        %v413 = vld [vmem:[%s291 + $0x30] sm:$0xf]
        %v414 = vld [vmem:[%s291 + $0x34] sm:$0xf]
        %v415 = vld [vmem:[%s291 + $0x38] sm:$0xf]
        %v416 = vld [vmem:[%s291 + $0x3c] sm:$0xf]
        %v417 = vld [vmem:[%s291 + $0x40] sm:$0xf]
        %v418 = vld [vmem:[%s291 + $0x44] sm:$0xf]
        %v419 = vld [vmem:[%s291 + $0x48] sm:$0xf]
        %v420 = vld [vmem:[%s291 + $0x4c] sm:$0xf]
        %v453 = vunpack.c.l.b16 %v369
        %v454 = vunpack.c.h.b16 %v369
        %v455 = vunpack.c.l.b16 %v370
        %v456 = vunpack.c.h.b16 %v370
        %v457 = vunpack.c.l.b16 %v371
        %v458 = vunpack.c.h.b16 %v371
        %v459 = vunpack.c.l.b16 %v372
        %v460 = vunpack.c.h.b16 %v372
        %v461 = vunpack.c.l.b16 %v373
        %v462 = vunpack.c.h.b16 %v373
        %v463 = vunpack.c.l.b16 %v374
        %v464 = vunpack.c.h.b16 %v374
        %v465 = vunpack.c.l.b16 %v375
        %v466 = vunpack.c.h.b16 %v375
        %v467 = vunpack.c.l.b16 %v376
        %v468 = vunpack.c.h.b16 %v376
        %v469 = vunpack.c.l.b16 %v377
        %v470 = vunpack.c.h.b16 %v377
        %v471 = vunpack.c.l.b16 %v378
        %v472 = vunpack.c.h.b16 %v378
        %v473 = vunpack.c.l.b16 %v379
        %v474 = vunpack.c.h.b16 %v379
        %v475 = vunpack.c.l.b16 %v380
        %v476 = vunpack.c.h.b16 %v380
        %v477 = vunpack.c.l.b16 %v381
        %v478 = vunpack.c.h.b16 %v381
        %v479 = vunpack.c.l.b16 %v382
        %v480 = vunpack.c.h.b16 %v382
        %v481 = vunpack.c.l.b16 %v383
        %v482 = vunpack.c.h.b16 %v383
        %v483 = vunpack.c.l.b16 %v384
        %v484 = vunpack.c.h.b16 %v384
        %v485 = vunpack.c.l.b16 %v385
        %v486 = vunpack.c.h.b16 %v385
        %v487 = vunpack.c.l.b16 %v386
        %v488 = vunpack.c.h.b16 %v386
        %v489 = vunpack.c.l.b16 %v387
        %v490 = vunpack.c.h.b16 %v387
        %v491 = vunpack.c.l.b16 %v388
        %v492 = vunpack.c.h.b16 %v388
        %v493 = vunpack.c.l.b16 %v389
        %v494 = vunpack.c.h.b16 %v389
        %v495 = vunpack.c.l.b16 %v390
        %v496 = vunpack.c.h.b16 %v390
        %v497 = vunpack.c.l.b16 %v391
        %v498 = vunpack.c.h.b16 %v391
        %v499 = vunpack.c.l.b16 %v392
        %v500 = vunpack.c.h.b16 %v392
        %v501 = vunpack.c.l.b16 %v393
        %v502 = vunpack.c.h.b16 %v393
        %v503 = vunpack.c.l.b16 %v394
        %v504 = vunpack.c.h.b16 %v394
        %v505 = vunpack.c.l.b16 %v395
        %v506 = vunpack.c.h.b16 %v395
        %v507 = vunpack.c.l.b16 %v396
        %v508 = vunpack.c.h.b16 %v396
        %v509 = vunpack.c.l.b16 %v397
        %v510 = vunpack.c.h.b16 %v397
        %v511 = vunpack.c.l.b16 %v398
        %v512 = vunpack.c.h.b16 %v398
        %v513 = vunpack.c.l.b16 %v399
        %v514 = vunpack.c.h.b16 %v399
        %v515 = vunpack.c.l.b16 %v400
        %v516 = vunpack.c.h.b16 %v400
        %v517 = vpack.c.b16 %v455, %v453
        %v518 = vpack.c.b16 %v456, %v454
        %v519 = vpack.c.b16 %v459, %v457
        %v520 = vpack.c.b16 %v460, %v458
        %v521 = vpack.c.b16 %v463, %v461
        %v522 = vpack.c.b16 %v464, %v462
        %v523 = vpack.c.b16 %v467, %v465
        %v524 = vpack.c.b16 %v468, %v466
        %v525 = vpack.c.b16 %v471, %v469
        %v526 = vpack.c.b16 %v472, %v470
        %v527 = vpack.c.b16 %v475, %v473
        %v528 = vpack.c.b16 %v476, %v474
        %v529 = vpack.c.b16 %v479, %v477
        %v530 = vpack.c.b16 %v480, %v478
        %v531 = vpack.c.b16 %v483, %v481
        %v532 = vpack.c.b16 %v484, %v482
        %v533 = vpack.c.b16 %v487, %v485
        %v534 = vpack.c.b16 %v488, %v486
        %v535 = vpack.c.b16 %v491, %v489
        %v536 = vpack.c.b16 %v492, %v490
        %v537 = vpack.c.b16 %v495, %v493
        %v538 = vpack.c.b16 %v496, %v494
        %v539 = vpack.c.b16 %v499, %v497
        %v540 = vpack.c.b16 %v500, %v498
        %v541 = vpack.c.b16 %v503, %v501
        %v542 = vpack.c.b16 %v504, %v502
        %v543 = vpack.c.b16 %v507, %v505
        %v544 = vpack.c.b16 %v508, %v506
        %v545 = vpack.c.b16 %v511, %v509
        %v546 = vpack.c.b16 %v512, %v510
        %v547 = vpack.c.b16 %v515, %v513
        %v548 = vpack.c.b16 %v516, %v514
        %v585 = vunpack.c.l.b16 %v401
        %v586 = vunpack.c.l.b16 %v402
        %v587 = vunpack.c.l.b16 %v403
        %v588 = vunpack.c.l.b16 %v404
        %v589 = vunpack.c.l.b16 %v405
        %v590 = vunpack.c.l.b16 %v406
        %v591 = vunpack.c.l.b16 %v407
        %v592 = vunpack.c.l.b16 %v408
        %v593 = vunpack.c.l.b16 %v409
        %v594 = vunpack.c.l.b16 %v410
        %v595 = vunpack.c.l.b16 %v411
        %v596 = vunpack.c.l.b16 %v412
        %v597 = vunpack.c.l.b16 %v413
        %v598 = vunpack.c.l.b16 %v414
        %v599 = vunpack.c.l.b16 %v415
        %v600 = vunpack.c.l.b16 %v416
        %v601 = vunpack.c.l.b16 %v417
        %v602 = vunpack.c.l.b16 %v418
        %v603 = vunpack.c.l.b16 %v419
        %v604 = vunpack.c.l.b16 %v420
        %v605 = vpack.c.b16 %v586, %v585
        %v606 = vpack.c.b16 %v588, %v587
        %v607 = vpack.c.b16 %v590, %v589
        %v608 = vpack.c.b16 %v592, %v591
        %v609 = vpack.c.b16 %v594, %v593
        %v610 = vpack.c.b16 %v596, %v595
        %v611 = vpack.c.b16 %v598, %v597
        %v612 = vpack.c.b16 %v600, %v599
        %v613 = vpack.c.b16 %v602, %v601
        %v614 = vpack.c.b16 %v604, %v603
        %vm625 = vcmask 261120
        %v627 = vsel %vm625, %v518, 0
        %v630 = vsel %vm625, %v520, 0
        %v633 = vsel %vm625, %v522, 0
        %v636 = vsel %vm625, %v524, 0
        %v639 = vsel %vm625, %v526, 0
        %v642 = vsel %vm625, %v528, 0
        %v645 = vsel %vm625, %v530, 0
        %v648 = vsel %vm625, %v532, 0
        %v651 = vsel %vm625, %v534, 0
        %v654 = vsel %vm625, %v536, 0
        %v657 = vsel %vm625, %v538, 0
        %v660 = vsel %vm625, %v540, 0
        %v663 = vsel %vm625, %v542, 0
        %v666 = vsel %vm625, %v544, 0
        %v669 = vsel %vm625, %v546, 0
        %v672 = vsel %vm625, %v548, 0
        %674 = vmatprep.subr.bf16.mxu0 0
        %675 = vmatpush1.bf16.msra.mxu0 %v605
        %676 = vmatprep.subr.bf16.mxu0 0
        %677 = vmatpush1.bf16.msra.mxu0 %v606
        %678 = vmatprep.subr.bf16.mxu0 0
        %679 = vmatpush1.bf16.msra.mxu0 %v607
        %680 = vmatprep.subr.bf16.mxu0 0
        %681 = vmatpush1.bf16.msra.mxu0 %v608
        %682 = vmatprep.subr.bf16.mxu0 0
        %683 = vmatpush1.bf16.msra.mxu0 %v609
        %684 = vmatprep.subr.bf16.mxu0 0
        %685 = vmatpush1.bf16.msra.mxu0 %v610
        %686 = vmatprep.subr.bf16.mxu0 0
        %687 = vmatpush1.bf16.msra.mxu0 %v611
        %688 = vmatprep.subr.bf16.mxu0 0
        %689 = vmatpush1.bf16.msra.mxu0 %v612
        %690 = vmatprep.subr.bf16.mxu0 0
        %691 = vmatpush1.bf16.msra.mxu0 %v613
        %692 = vmatprep.subr.bf16.mxu0 0
        %693 = vmatpush1.bf16.msra.mxu0 %v614
        %694 = vmatprep.subr.bf16.mxu0 0
        %695 = vmatpush1.bf16.msra.mxu0 0
        %696 = vmatprep.subr.bf16.mxu0 0
        %697 = vmatpush1.bf16.msra.mxu0 0
        %698 = vmatprep.subr.bf16.mxu0 0
        %699 = vmatpush1.bf16.msra.mxu0 0
        %700 = vmatprep.subr.bf16.mxu0 0
        %701 = vmatpush1.bf16.msra.mxu0 0
        %702 = vmatprep.subr.bf16.mxu0 0
        %703 = vmatpush1.bf16.msra.mxu0 0
        %704 = vmatprep.subr.bf16.mxu0 0
        %705 = vmatpush1.bf16.msra.mxu0 0
        %706 = vmatprep.mubr.bf16.mxu0 %v627
        %707 = vmatmul.mubr.bf16.gmra.mrb[0].mxu0 %v517
        %v708 = vpop.f32.mrb[0].mxu0
        %v709 = vadd.f32 0.0, %v708
        %v710 = vpop.f32.mrb[0].mxu0
        %v711 = vpop.f32.mrb[0].mxu0
        %v712 = vadd.f32 0.0, %v711
        %v713 = vpop.f32.mrb[0].mxu0
        %714 = vmatprep.mubr.bf16.mxu0 %v630
        %715 = vmatmul.mubr.bf16.gmra.mrb[0].mxu0 %v519
        %v716 = vpop.f32.mrb[0].mxu0
        %v717 = vadd.f32 0.0, %v716
        %v718 = vpop.f32.mrb[0].mxu0
        %v719 = vpop.f32.mrb[0].mxu0
        %v720 = vadd.f32 0.0, %v719
        %v721 = vpop.f32.mrb[0].mxu0
        %722 = vmatprep.mubr.bf16.mxu0 %v633
        %723 = vmatmul.mubr.bf16.gmra.mrb[0].mxu0 %v521
        %v724 = vpop.f32.mrb[0].mxu0
        %v725 = vadd.f32 0.0, %v724
        %v726 = vpop.f32.mrb[0].mxu0
        %v727 = vpop.f32.mrb[0].mxu0
        %v728 = vadd.f32 0.0, %v727
        %v729 = vpop.f32.mrb[0].mxu0
        %730 = vmatprep.mubr.bf16.mxu0 %v636
        %731 = vmatmul.mubr.bf16.gmra.mrb[0].mxu0 %v523
        %v732 = vpop.f32.mrb[0].mxu0
        %v733 = vadd.f32 0.0, %v732
        %v734 = vpop.f32.mrb[0].mxu0
        %v735 = vpop.f32.mrb[0].mxu0
        %v736 = vadd.f32 0.0, %v735
        %v737 = vpop.f32.mrb[0].mxu0
        %738 = vmatprep.mubr.bf16.mxu0 %v639
        %739 = vmatmul.mubr.bf16.gmra.mrb[0].mxu0 %v525
        %v740 = vpop.f32.mrb[0].mxu0
        %v741 = vadd.f32 0.0, %v740
        %v742 = vpop.f32.mrb[0].mxu0
        %v743 = vpop.f32.mrb[0].mxu0
        %v744 = vadd.f32 0.0, %v743
        %v745 = vpop.f32.mrb[0].mxu0
        %746 = vmatprep.mubr.bf16.mxu0 %v642
        %747 = vmatmul.mubr.bf16.gmra.mrb[0].mxu0 %v527
        %v748 = vpop.f32.mrb[0].mxu0
        %v749 = vadd.f32 0.0, %v748
        %v750 = vpop.f32.mrb[0].mxu0
        %v751 = vpop.f32.mrb[0].mxu0
        %v752 = vadd.f32 0.0, %v751
        %v753 = vpop.f32.mrb[0].mxu0
        %754 = vmatprep.mubr.bf16.mxu0 %v645
        %755 = vmatmul.mubr.bf16.gmra.mrb[0].mxu0 %v529
        %v756 = vpop.f32.mrb[0].mxu0
        %v757 = vadd.f32 0.0, %v756
        %v758 = vpop.f32.mrb[0].mxu0
        %v759 = vpop.f32.mrb[0].mxu0
        %v760 = vadd.f32 0.0, %v759
        %v761 = vpop.f32.mrb[0].mxu0
        %762 = vmatprep.mubr.bf16.mxu0 %v648
        %763 = vmatmul.mubr.bf16.gmra.mrb[0].mxu0 %v531
        %v764 = vpop.f32.mrb[0].mxu0
        %v765 = vadd.f32 0.0, %v764
        %v766 = vpop.f32.mrb[0].mxu0
        %v767 = vpop.f32.mrb[0].mxu0
        %v768 = vadd.f32 0.0, %v767
        %v769 = vpop.f32.mrb[0].mxu0
        %770 = vmatprep.mubr.bf16.mxu0 %v651
        %771 = vmatmul.mubr.bf16.gmra.mrb[0].mxu0 %v533
        %v772 = vpop.f32.mrb[0].mxu0
        %v773 = vadd.f32 0.0, %v772
        %v774 = vpop.f32.mrb[0].mxu0
        %v775 = vpop.f32.mrb[0].mxu0
        %v776 = vadd.f32 0.0, %v775
        %v777 = vpop.f32.mrb[0].mxu0
        %778 = vmatprep.mubr.bf16.mxu0 %v654
        %779 = vmatmul.mubr.bf16.gmra.mrb[0].mxu0 %v535
        %v780 = vpop.f32.mrb[0].mxu0
        %v781 = vadd.f32 0.0, %v780
        %v782 = vpop.f32.mrb[0].mxu0
        %v783 = vpop.f32.mrb[0].mxu0
        %v784 = vadd.f32 0.0, %v783
        %v785 = vpop.f32.mrb[0].mxu0
        %786 = vmatprep.mubr.bf16.mxu0 %v657
        %787 = vmatmul.mubr.bf16.gmra.mrb[0].mxu0 %v537
        %v788 = vpop.f32.mrb[0].mxu0
        %v789 = vadd.f32 0.0, %v788
        %v790 = vpop.f32.mrb[0].mxu0
        %v791 = vpop.f32.mrb[0].mxu0
        %v792 = vadd.f32 0.0, %v791
        %v793 = vpop.f32.mrb[0].mxu0
        %794 = vmatprep.mubr.bf16.mxu0 %v660
        %795 = vmatmul.mubr.bf16.gmra.mrb[0].mxu0 %v539
        %v796 = vpop.f32.mrb[0].mxu0
        %v797 = vadd.f32 0.0, %v796
        %v798 = vpop.f32.mrb[0].mxu0
        %v799 = vpop.f32.mrb[0].mxu0
        %v800 = vadd.f32 0.0, %v799
        %v801 = vpop.f32.mrb[0].mxu0
        %802 = vmatprep.mubr.bf16.mxu0 %v663
        %803 = vmatmul.mubr.bf16.gmra.mrb[0].mxu0 %v541
        %v804 = vpop.f32.mrb[0].mxu0
        %v805 = vadd.f32 0.0, %v804
        %v806 = vpop.f32.mrb[0].mxu0
        %v807 = vpop.f32.mrb[0].mxu0
        %v808 = vadd.f32 0.0, %v807
        %v809 = vpop.f32.mrb[0].mxu0
        %810 = vmatprep.mubr.bf16.mxu0 %v666
        %811 = vmatmul.mubr.bf16.gmra.mrb[0].mxu0 %v543
        %v812 = vpop.f32.mrb[0].mxu0
        %v813 = vadd.f32 0.0, %v812
        %v814 = vpop.f32.mrb[0].mxu0
        %v815 = vpop.f32.mrb[0].mxu0
        %v816 = vadd.f32 0.0, %v815
        %v817 = vpop.f32.mrb[0].mxu0
        %818 = vmatprep.mubr.bf16.mxu0 %v669
        %819 = vmatmul.mubr.bf16.gmra.mrb[0].mxu0 %v545
        %v820 = vpop.f32.mrb[0].mxu0
        %v821 = vadd.f32 0.0, %v820
        %v822 = vpop.f32.mrb[0].mxu0
        %v823 = vpop.f32.mrb[0].mxu0
        %v824 = vadd.f32 0.0, %v823
        %v825 = vpop.f32.mrb[0].mxu0
        %826 = vmatprep.mubr.bf16.mxu0 %v672
        %827 = vmatmul.mubr.bf16.gmra.mrb[0].mxu0 %v547
        %v828 = vpop.f32.mrb[0].mxu0
        %v829 = vadd.f32 0.0, %v828
        %v830 = vpop.f32.mrb[0].mxu0
        %v831 = vpop.f32.mrb[0].mxu0
        %v832 = vadd.f32 0.0, %v831
        %v833 = vpop.f32.mrb[0].mxu0
        %834 = vdwg.mxu0
        %v835 = vadd.f32 %v337, %v709
        %v836 = vadd.f32 %v338, %v712
        %v837 = vadd.f32 %v339, %v717
        %v838 = vadd.f32 %v340, %v720
        %v839 = vadd.f32 %v341, %v725
        %v840 = vadd.f32 %v342, %v728
        %v841 = vadd.f32 %v343, %v733
        %v842 = vadd.f32 %v344, %v736
        %v843 = vadd.f32 %v345, %v741
        %v844 = vadd.f32 %v346, %v744
        %v845 = vadd.f32 %v347, %v749
        %v846 = vadd.f32 %v348, %v752
        %v847 = vadd.f32 %v349, %v757
        %v848 = vadd.f32 %v350, %v760
        %v849 = vadd.f32 %v351, %v765
        %v850 = vadd.f32 %v352, %v768
        %v851 = vadd.f32 %v353, %v773
        %v852 = vadd.f32 %v354, %v776
        %v853 = vadd.f32 %v355, %v781
        %v854 = vadd.f32 %v356, %v784
        %v855 = vadd.f32 %v357, %v789
        %v856 = vadd.f32 %v358, %v792
        %v857 = vadd.f32 %v359, %v797
        %v858 = vadd.f32 %v360, %v800
        %v859 = vadd.f32 %v361, %v805
        %v860 = vadd.f32 %v362, %v808
        %v861 = vadd.f32 %v363, %v813
        %v862 = vadd.f32 %v364, %v816
        %v863 = vadd.f32 %v365, %v821
        %v864 = vadd.f32 %v366, %v824
        %v865 = vadd.f32 %v367, %v829
        %v866 = vadd.f32 %v368, %v832
        %867 = vst [vmem:[%s271] sm:$0xff] %v835
        %868 = vst [vmem:[%s271 + $0x8] sm:$0xff] %v836
        %869 = vst [vmem:[%s271 + $0x10] sm:$0xff] %v837
        %870 = vst [vmem:[%s271 + $0x18] sm:$0xff] %v838
        %871 = vst [vmem:[%s271 + $0x20] sm:$0xff] %v839
        %872 = vst [vmem:[%s271 + $0x28] sm:$0xff] %v840
        %873 = vst [vmem:[%s271 + $0x30] sm:$0xff] %v841
        %874 = vst [vmem:[%s271 + $0x38] sm:$0xff] %v842
        %875 = vst [vmem:[%s271 + $0x40] sm:$0xff] %v843
        %876 = vst [vmem:[%s271 + $0x48] sm:$0xff] %v844
        %877 = vst [vmem:[%s271 + $0x50] sm:$0xff] %v845
        %878 = vst [vmem:[%s271 + $0x58] sm:$0xff] %v846
        %879 = vst [vmem:[%s271 + $0x60] sm:$0xff] %v847
        %880 = vst [vmem:[%s271 + $0x68] sm:$0xff] %v848
        %881 = vst [vmem:[%s271 + $0x70] sm:$0xff] %v849
        %882 = vst [vmem:[%s271 + $0x78] sm:$0xff] %v850
        %883 = vst [vmem:[%s271 + $0x80] sm:$0xff] %v851
        %884 = vst [vmem:[%s271 + $0x88] sm:$0xff] %v852
        %885 = vst [vmem:[%s271 + $0x90] sm:$0xff] %v853
        %886 = vst [vmem:[%s271 + $0x98] sm:$0xff] %v854
        %887 = vst [vmem:[%s271 + $0xa0] sm:$0xff] %v855
        %888 = vst [vmem:[%s271 + $0xa8] sm:$0xff] %v856
        %889 = vst [vmem:[%s271 + $0xb0] sm:$0xff] %v857
        %890 = vst [vmem:[%s271 + $0xb8] sm:$0xff] %v858
        %891 = vst [vmem:[%s271 + $0xc0] sm:$0xff] %v859
        %892 = vst [vmem:[%s271 + $0xc8] sm:$0xff] %v860
        %893 = vst [vmem:[%s271 + $0xd0] sm:$0xff] %v861
        %894 = vst [vmem:[%s271 + $0xd8] sm:$0xff] %v862
        %895 = vst [vmem:[%s271 + $0xe0] sm:$0xff] %v863
        %896 = vst [vmem:[%s271 + $0xe8] sm:$0xff] %v864
        %897 = vst [vmem:[%s271 + $0xf0] sm:$0xff] %v865
        %898 = vst [vmem:[%s271 + $0xf8] sm:$0xff] %v866
        // Predicated region
        $region41: #{tpu_custom_call.1} parent=35 // pred_check
          %p899 = pneg %p301
        $region42: #{tpu_custom_call.1} parent=35 // pred_check_branch
          %901 = sbr.rel (%p899) target = $region44
        $region43: #{tpu_custom_call.1} parent=35 // pred_region
          %v902 = vld [vmem:[%s271] sm:$0xff]
          %v903 = vld [vmem:[%s271 + $0x8] sm:$0xff]
          %v904 = vld [vmem:[%s271 + $0x10] sm:$0xff]
          %v905 = vld [vmem:[%s271 + $0x18] sm:$0xff]
          %v906 = vld [vmem:[%s271 + $0x20] sm:$0xff]
          %v907 = vld [vmem:[%s271 + $0x28] sm:$0xff]
          %v908 = vld [vmem:[%s271 + $0x30] sm:$0xff]
          %v909 = vld [vmem:[%s271 + $0x38] sm:$0xff]
          %v910 = vld [vmem:[%s271 + $0x40] sm:$0xff]
          %v911 = vld [vmem:[%s271 + $0x48] sm:$0xff]
          %v912 = vld [vmem:[%s271 + $0x50] sm:$0xff]
          %v913 = vld [vmem:[%s271 + $0x58] sm:$0xff]
          %v914 = vld [vmem:[%s271 + $0x60] sm:$0xff]
          %v915 = vld [vmem:[%s271 + $0x68] sm:$0xff]
          %v916 = vld [vmem:[%s271 + $0x70] sm:$0xff]
          %v917 = vld [vmem:[%s271 + $0x78] sm:$0xff]
          %v918 = vld [vmem:[%s271 + $0x80] sm:$0xff]
          %v919 = vld [vmem:[%s271 + $0x88] sm:$0xff]
          %v920 = vld [vmem:[%s271 + $0x90] sm:$0xff]
          %v921 = vld [vmem:[%s271 + $0x98] sm:$0xff]
          %v922 = vld [vmem:[%s271 + $0xa0] sm:$0xff]
          %v923 = vld [vmem:[%s271 + $0xa8] sm:$0xff]
          %v924 = vld [vmem:[%s271 + $0xb0] sm:$0xff]
          %v925 = vld [vmem:[%s271 + $0xb8] sm:$0xff]
          %v926 = vld [vmem:[%s271 + $0xc0] sm:$0xff]
          %v927 = vld [vmem:[%s271 + $0xc8] sm:$0xff]
          %v928 = vld [vmem:[%s271 + $0xd0] sm:$0xff]
          %v929 = vld [vmem:[%s271 + $0xd8] sm:$0xff]
          %v930 = vld [vmem:[%s271 + $0xe0] sm:$0xff]
          %v931 = vld [vmem:[%s271 + $0xe8] sm:$0xff]
          %v932 = vld [vmem:[%s271 + $0xf0] sm:$0xff]
          %v933 = vld [vmem:[%s271 + $0xf8] sm:$0xff]
          %v934 = vld [vmem:[%s295] sm:$0x1]
          %v936 = vlaneseq
          %v937 = vshrl.u32 %v936, 7
          %v938 = vsub.s32 0, %v937
          %v939 = vrot.slane %v934, %v938
          %v941 = vmul.f32 %v902, %v939
          %v942 = vmul.f32 %v903, %v939
          %v943 = vmul.f32 %v904, %v939
          %v944 = vmul.f32 %v905, %v939
          %v945 = vmul.f32 %v906, %v939
          %v946 = vmul.f32 %v907, %v939
          %v947 = vmul.f32 %v908, %v939
          %v948 = vmul.f32 %v909, %v939
          %v949 = vmul.f32 %v910, %v939
          %v950 = vmul.f32 %v911, %v939
          %v951 = vmul.f32 %v912, %v939
          %v952 = vmul.f32 %v913, %v939
          %v953 = vmul.f32 %v914, %v939
          %v954 = vmul.f32 %v915, %v939
          %v955 = vmul.f32 %v916, %v939
          %v956 = vmul.f32 %v917, %v939
          %v957 = vmul.f32 %v918, %v939
          %v958 = vmul.f32 %v919, %v939
          %v959 = vmul.f32 %v920, %v939
          %v960 = vmul.f32 %v921, %v939
          %v961 = vmul.f32 %v922, %v939
          %v962 = vmul.f32 %v923, %v939
          %v963 = vmul.f32 %v924, %v939
          %v964 = vmul.f32 %v925, %v939
          %v965 = vmul.f32 %v926, %v939
          %v966 = vmul.f32 %v927, %v939
          %v967 = vmul.f32 %v928, %v939
          %v968 = vmul.f32 %v929, %v939
          %v969 = vmul.f32 %v930, %v939
          %v970 = vmul.f32 %v931, %v939
          %v971 = vmul.f32 %v932, %v939
          %v972 = vmul.f32 %v933, %v939
          %v973 = vld [vmem:[%s298] sm:$0x1]
          %v975 = vlaneseq
          %v976 = vshrl.u32 %v975, 7
          %v977 = vsub.s32 0, %v976
          %v978 = vrot.slane %v973, %v977
          %v980 = vadd.f32 %v941, %v978
          %v981 = vadd.f32 %v942, %v978
          %v982 = vadd.f32 %v943, %v978
          %v983 = vadd.f32 %v944, %v978
          %v984 = vadd.f32 %v945, %v978
          %v985 = vadd.f32 %v946, %v978
          %v986 = vadd.f32 %v947, %v978
          %v987 = vadd.f32 %v948, %v978
          %v988 = vadd.f32 %v949, %v978
          %v989 = vadd.f32 %v950, %v978
          %v990 = vadd.f32 %v951, %v978
          %v991 = vadd.f32 %v952, %v978
          %v992 = vadd.f32 %v953, %v978
          %v993 = vadd.f32 %v954, %v978
          %v994 = vadd.f32 %v955, %v978
          %v995 = vadd.f32 %v956, %v978
          %v996 = vadd.f32 %v957, %v978
          %v997 = vadd.f32 %v958, %v978
          %v998 = vadd.f32 %v959, %v978
          %v999 = vadd.f32 %v960, %v978
          %v1000 = vadd.f32 %v961, %v978
          %v1001 = vadd.f32 %v962, %v978
          %v1002 = vadd.f32 %v963, %v978
          %v1003 = vadd.f32 %v964, %v978
          %v1004 = vadd.f32 %v965, %v978
          %v1005 = vadd.f32 %v966, %v978
          %v1006 = vadd.f32 %v967, %v978
          %v1007 = vadd.f32 %v968, %v978
          %v1008 = vadd.f32 %v969, %v978
          %v1009 = vadd.f32 %v970, %v978
          %v1010 = vadd.f32 %v971, %v978
          %v1011 = vadd.f32 %v972, %v978
          %v1012 = vmax.f32 %v980, 0.0
          %v1013 = vmax.f32 %v981, 0.0
          %v1014 = vmax.f32 %v982, 0.0
          %v1015 = vmax.f32 %v983, 0.0
          %v1016 = vmax.f32 %v984, 0.0
          %v1017 = vmax.f32 %v985, 0.0
          %v1018 = vmax.f32 %v986, 0.0
          %v1019 = vmax.f32 %v987, 0.0
          %v1020 = vmax.f32 %v988, 0.0
          %v1021 = vmax.f32 %v989, 0.0
          %v1022 = vmax.f32 %v990, 0.0
          %v1023 = vmax.f32 %v991, 0.0
          %v1024 = vmax.f32 %v992, 0.0
          %v1025 = vmax.f32 %v993, 0.0
          %v1026 = vmax.f32 %v994, 0.0
          %v1027 = vmax.f32 %v995, 0.0
          %v1028 = vmax.f32 %v996, 0.0
          %v1029 = vmax.f32 %v997, 0.0
          %v1030 = vmax.f32 %v998, 0.0
          %v1031 = vmax.f32 %v999, 0.0
          %v1032 = vmax.f32 %v1000, 0.0
          %v1033 = vmax.f32 %v1001, 0.0
          %v1034 = vmax.f32 %v1002, 0.0
          %v1035 = vmax.f32 %v1003, 0.0
          %v1036 = vmax.f32 %v1004, 0.0
          %v1037 = vmax.f32 %v1005, 0.0
          %v1038 = vmax.f32 %v1006, 0.0
          %v1039 = vmax.f32 %v1007, 0.0
          %v1040 = vmax.f32 %v1008, 0.0
          %v1041 = vmax.f32 %v1009, 0.0
          %v1042 = vmax.f32 %v1010, 0.0
          %v1043 = vmax.f32 %v1011, 0.0
          %1044 = vst [vmem:[%s271] sm:$0xff] %v1012
          %1045 = vst [vmem:[%s271 + $0x8] sm:$0xff] %v1013
          %1046 = vst [vmem:[%s271 + $0x10] sm:$0xff] %v1014
          %1047 = vst [vmem:[%s271 + $0x18] sm:$0xff] %v1015
          %1048 = vst [vmem:[%s271 + $0x20] sm:$0xff] %v1016
          %1049 = vst [vmem:[%s271 + $0x28] sm:$0xff] %v1017
          %1050 = vst [vmem:[%s271 + $0x30] sm:$0xff] %v1018
          %1051 = vst [vmem:[%s271 + $0x38] sm:$0xff] %v1019
          %1052 = vst [vmem:[%s271 + $0x40] sm:$0xff] %v1020
          %1053 = vst [vmem:[%s271 + $0x48] sm:$0xff] %v1021
          %1054 = vst [vmem:[%s271 + $0x50] sm:$0xff] %v1022
          %1055 = vst [vmem:[%s271 + $0x58] sm:$0xff] %v1023
          %1056 = vst [vmem:[%s271 + $0x60] sm:$0xff] %v1024
          %1057 = vst [vmem:[%s271 + $0x68] sm:$0xff] %v1025
          %1058 = vst [vmem:[%s271 + $0x70] sm:$0xff] %v1026
          %1059 = vst [vmem:[%s271 + $0x78] sm:$0xff] %v1027
          %1060 = vst [vmem:[%s271 + $0x80] sm:$0xff] %v1028
          %1061 = vst [vmem:[%s271 + $0x88] sm:$0xff] %v1029
          %1062 = vst [vmem:[%s271 + $0x90] sm:$0xff] %v1030
          %1063 = vst [vmem:[%s271 + $0x98] sm:$0xff] %v1031
          %1064 = vst [vmem:[%s271 + $0xa0] sm:$0xff] %v1032
          %1065 = vst [vmem:[%s271 + $0xa8] sm:$0xff] %v1033
          %1066 = vst [vmem:[%s271 + $0xb0] sm:$0xff] %v1034
          %1067 = vst [vmem:[%s271 + $0xb8] sm:$0xff] %v1035
          %1068 = vst [vmem:[%s271 + $0xc0] sm:$0xff] %v1036
          %1069 = vst [vmem:[%s271 + $0xc8] sm:$0xff] %v1037
          %1070 = vst [vmem:[%s271 + $0xd0] sm:$0xff] %v1038
          %1071 = vst [vmem:[%s271 + $0xd8] sm:$0xff] %v1039
          %1072 = vst [vmem:[%s271 + $0xe0] sm:$0xff] %v1040
          %1073 = vst [vmem:[%s271 + $0xe8] sm:$0xff] %v1041
          %1074 = vst [vmem:[%s271 + $0xf0] sm:$0xff] %v1042
          %1075 = vst [vmem:[%s271 + $0xf8] sm:$0xff] %v1043
        $region44: #{tpu_custom_call.1} parent=35 // pred_fallthru
          _
        %s1076 = sand.u32 %s155, 1
        %s1077 = scalar_lea.sflag [#allocation3], %s1076
        %s1078 = sand.u32 %s155, 1
        %s1079 = smul.addr %s1078, 256
        %s1080 = scalar_lea.vmem [#allocation2], %s1079
        // Predicated region
        $region45: #{tpu_custom_call.1} parent=35 // pred_check
          %p1081 = pneg %p165
        $region46: #{tpu_custom_call.1} parent=35 // pred_check_branch
          %1083 = sbr.rel (%p1081) target = $region48
        $region47: #{tpu_custom_call.1} parent=35 // pred_region
          %s1084 = smul.u32 32, %s23
          %s1086 = ssub.s32 4096, 4096
          %1087 = vsyncadd %s1077, %s1086
          %s1088 = sadd.s32 %s24, %s1084
          %s1089 = smul.addr %s1088, 128
          %s1090 = scalar_lea.hbm %s4, %s1089
          %s1091 = sshll.u32 %s1080, 4
          %s1092 = int_to_ptr.vmem [resolvable:$true] %s1091
          %1097 = dma.vmem_to_hbm [thread:$0]  %s1092, 4096, %s1090, %s1077, 128, 128, 8
        $region48: #{tpu_custom_call.1} parent=35 // pred_fallthru
          _
      $region36: #{tpu_custom_call.1} parent=5 // pred_fallthru
        _
      %p1098 = scmp.le.s32.totalorder 2, %s13
      // Predicated region
      $region49: #{tpu_custom_call.1} parent=5 // pred_check
        %p1099 = pneg %p1098
      $region50: #{tpu_custom_call.1} parent=5 // pred_check_branch
        %1101 = sbr.rel (%p1099) target = $region52
      $region51: #{tpu_custom_call.1} parent=5 // pred_region
        %s1102 = ssub.s32 %s13, 2
        // Predicated region
        $region53: #{tpu_custom_call.1} parent=51 // pred_check
          %p1103 = pneg %p171
        $region54: #{tpu_custom_call.1} parent=51 // pred_check_branch
          %1105 = sbr.rel (%p1103) target = $region56
        $region55: #{tpu_custom_call.1} parent=51 // pred_region
          %s1106 = sand.u32 %s156, 1
          %s1107 = scalar_lea.sflag [#allocation3], %s1106
          %s1108 = sand.u32 %s156, 1
          %s1109 = smul.addr %s1108, 256
          %s1110 = scalar_lea.vmem [#allocation2], %s1109
          %1111 = dma.done %s1107, 4096
        $region56: #{tpu_custom_call.1} parent=51 // pred_fallthru
          _
      $region52: #{tpu_custom_call.1} parent=5 // pred_fallthru
        _
    $region6: #{tpu_custom_call.1} parent=1 // loop_footer
      %s17 = sadd.s32 1, %s13
    $region7: #{tpu_custom_call.1} parent=1 // loop_footer_branch
      %12 = sbr.rel target = $region3
    $region8: #{tpu_custom_call.1} parent=1 // loop_exit
      _
    %1112 = vsyncpa [#allocation3], 1
    %s1113 = scalar_lea.sflag [#allocation3], 1
    %1114 = vsyncpa %s1113, 1

</llo_original>
